<compile_context>
chip_gen: v7x
topology: tpu7x:2x2x1
jax: 0.10.0
libtpu: 0.0.40
codegen_flags: <defaults>
</compile_context>

<pallas_src>
import functools

import jax
import jax.numpy as jnp
from jax.experimental import pallas as pl
from jax.experimental.pallas import tpu as pltpu


# -----------------------------------------------------------------------------
# Parameter setup (glue): build the `pe` buffer exactly like the PyTorch init.
# -----------------------------------------------------------------------------
def make_positional_encoding(max_len: int, d_model: int, dtype=jnp.float32):
    position = jnp.arange(0, max_len, dtype=jnp.float32)[:, None]            # (L, 1)
    div_term = jnp.exp(
        jnp.arange(0, d_model, 2, dtype=jnp.float32)
        * (-jnp.log(jnp.float32(10000.0)) / d_model)
    )                                                                         # (D/2,)
    pe = jnp.zeros((max_len, d_model), dtype=jnp.float32)
    pe = pe.at[:, 0::2].set(jnp.sin(position * div_term))
    pe = pe.at[:, 1::2].set(jnp.cos(position * div_term))
    return pe[:, None, :].astype(dtype)                                       # (L, 1, D)


def _keep_threshold(p: float) -> int:
    # keep with probability (1 - p):  keep <=> bits < threshold
    return min(int((1.0 - p) * (2 ** 32)), 2 ** 32 - 1)


# -----------------------------------------------------------------------------
# Pallas kernel: y = dropout(x + pe_tile)
# -----------------------------------------------------------------------------
def _pe_dropout_kernel(*refs, apply_dropout, threshold, inv_keep):
    if apply_dropout:
        x_ref, pe_ref, bits_ref, o_ref = refs
    else:
        x_ref, pe_ref, o_ref = refs

    # Add in f32 (matches PyTorch, where the f32 `pe` buffer promotes the add);
    # pe_ref is (ts, 1, D) and broadcasts over the batch axis of (ts, B, D).
    y = x_ref[...].astype(jnp.float32) + pe_ref[...].astype(jnp.float32)

    if apply_dropout:
        # Inverted dropout: keep with prob (1-p), scale kept values by 1/(1-p).
        keep = bits_ref[...] < jnp.uint32(threshold)
        y = jnp.where(keep, y * jnp.float32(inv_keep), jnp.float32(0.0))

    o_ref[...] = y.astype(o_ref.dtype)


# -----------------------------------------------------------------------------
# Tile-size choice: ~1 MiB of HBM traffic per grid step so double-buffered
# blocks stay well inside every chip's scoped-VMEM default (v5e 16 MiB,
# v6e/v7x 32 MiB, v7x 64 MiB physical) while giving the pipeline many steps.
# -----------------------------------------------------------------------------
def _choose_ts(S, B, D, itemsize, training):
    row_bytes = B * D * (2 * itemsize + (4 if training else 0)) + D * 4  # x+out(+bits)+pe
    target = 1 << 20
    if S * row_bytes <= target:
        return S
    hi = min(S, max(1, target // row_bytes))
    for ts in range(hi, 0, -1):
        if S % ts == 0:
            return ts
    return S


# -----------------------------------------------------------------------------
# Wrapper
# -----------------------------------------------------------------------------
def positional_encoding_forward(x, pe, *, p=0.1, training=False, rng_key=None,
                                ts=None):
    """x: (S, B, D); pe: (max_len, 1, D) from make_positional_encoding.

    Returns dropout(x + pe[:S]) with the same semantics as the PyTorch module.
    """
    S, B, D = x.shape
    max_len = pe.shape[0]
    assert max_len >= S and pe.shape[1] == 1 and pe.shape[2] == D

    apply_dropout = bool(training) and float(p) > 0.0

    if ts is None:
        ts = _choose_ts(S, B, D, jnp.dtype(x.dtype).itemsize, apply_dropout)
    assert S % ts == 0, f"tile size {ts} must divide seq_len {S}"
    grid = (S // ts,)

    threshold = _keep_threshold(float(p))
    kernel = functools.partial(
        _pe_dropout_kernel,
        apply_dropout=apply_dropout,
        threshold=threshold,
        inv_keep=1.0 / (1.0 - float(p)) if apply_dropout else 1.0,
    )

    # pe is tiled directly from the (max_len, 1, D) buffer: no wrapper-side
    # slice/cast pass, and the size-1 batch axis broadcasts in-kernel.
    in_specs = [
        pl.BlockSpec((ts, B, D), lambda i: (i, 0, 0)),   # x
        pl.BlockSpec((ts, 1, D), lambda i: (i, 0, 0)),   # pe rows [i*ts, (i+1)*ts)
    ]
    inputs = [x, pe]

    if apply_dropout:
        if rng_key is None:
            rng_key = jax.random.PRNGKey(0)
        bits = jax.random.bits(rng_key, (S, B, D), dtype=jnp.uint32)
        in_specs.append(pl.BlockSpec((ts, B, D), lambda i: (i, 0, 0)))
        inputs.append(bits)

    return pl.pallas_call(
        kernel,
        out_shape=jax.ShapeDtypeStruct((S, B, D), x.dtype),
        grid_spec=pltpu.PrefetchScalarGridSpec(
            num_scalar_prefetch=0,
            grid=grid,
            in_specs=in_specs,
            out_specs=pl.BlockSpec((ts, B, D), lambda i: (i, 0, 0)),
        ),
        # No carried state across the grid axis -> safe to shard across both
        # TensorCores on v7x; measured-neutral on single-TC v5e/v6e.
        compiler_params=pltpu.CompilerParams(
            dimension_semantics=("parallel",),
        ),
    )(*inputs)


# -----------------------------------------------------------------------------
# Demo / self-check
# -----------------------------------------------------------------------------
if __name__ == "__main__":
    D_MODEL = 32
    MAX_LEN = 64
    SEQ = 8
    BATCH = 4
    P_DROP = 0.1

    key = jax.random.PRNGKey(0)
    x_key, drop_key = jax.random.split(key)
    x = jax.random.normal(x_key, (SEQ, BATCH, D_MODEL), dtype=jnp.float32)
    pe = make_positional_encoding(MAX_LEN, D_MODEL, dtype=jnp.float32)

    ref = x + pe[:SEQ]                                    # (S,1,D) broadcasts over B

    # Eval mode (dropout is identity) -> deterministic check vs pure-JAX ref.
    y_eval = jax.block_until_ready(
        positional_encoding_forward(x, pe, p=P_DROP, training=False))
    assert y_eval.shape == (SEQ, BATCH, D_MODEL)
    assert jnp.allclose(y_eval, ref, atol=1e-6, rtol=1e-6)

    # Training mode: dropout mask is a deterministic function of drop_key, so
    # we can reconstruct the exact expected output.
    y_train = jax.block_until_ready(
        positional_encoding_forward(x, pe, p=P_DROP, training=True,
                                    rng_key=drop_key))
    assert y_train.shape == (SEQ, BATCH, D_MODEL)
    bits = jax.random.bits(drop_key, (SEQ, BATCH, D_MODEL), dtype=jnp.uint32)
    keep = bits < jnp.uint32(_keep_threshold(P_DROP))
    expected = jnp.where(keep, ref / (1.0 - P_DROP), 0.0)
    assert jnp.allclose(y_train, expected, atol=1e-5, rtol=1e-5)

    print("KERNEL_OK")
</pallas_src>

<mosaic_0001>
module attributes {stable_mosaic.version = 11 : i64} {
  func.func @_pe_dropout_kernel(%arg0: i32, %arg1: memref<8x4x32xf32, #tpu.memory_space<vmem>>, %arg2: memref<8x1x32xf32, #tpu.memory_space<vmem>>, %arg3: memref<8x4x32xf32, #tpu.memory_space<vmem>>) attributes {dimension_semantics = [#tpu.dimension_semantics<parallel>], iteration_bounds = array<i64: 1>, scalar_prefetch = 0 : i64, scratch_operands = 0 : i64, tpu.core_type = #tpu.core_type<tc>, window_params = [{transform_indices = @transform_0, window_bounds = array<i64: 8, 4, 32>}, {transform_indices = @transform_1, window_bounds = array<i64: 8, 1, 32>}, {transform_indices = @transform_2, window_bounds = array<i64: 8, 4, 32>}]} {
    %c0 = arith.constant 0 : index
    %c0_0 = arith.constant 0 : index
    %c0_1 = arith.constant 0 : index
    %0 = vector.load %arg1[%c0, %c0_0, %c0_1] : memref<8x4x32xf32, #tpu.memory_space<vmem>>, vector<8x4x32xf32>
    %c0_2 = arith.constant 0 : index
    %c0_3 = arith.constant 0 : index
    %c0_4 = arith.constant 0 : index
    %1 = vector.load %arg2[%c0_2, %c0_3, %c0_4] : memref<8x1x32xf32, #tpu.memory_space<vmem>>, vector<8x1x32xf32>
    %2 = vector.broadcast %1 : vector<8x1x32xf32> to vector<8x4x32xf32>
    %3 = arith.addf %0, %2 : vector<8x4x32xf32>
    %c0_5 = arith.constant 0 : index
    %c0_6 = arith.constant 0 : index
    %c0_7 = arith.constant 0 : index
    %4 = vector.load %arg3[%c0_5, %c0_6, %c0_7] : memref<8x4x32xf32, #tpu.memory_space<vmem>>, vector<8x4x32xf32>
    tpu.vector_store %arg3[%c0_5, %c0_6, %c0_7], %3 {strides = array<i32>} : memref<8x4x32xf32, #tpu.memory_space<vmem>>, vector<8x4x32xf32>,
    return
  }
  func.func @transform_0(%arg0: i32) -> (i32, i32, i32) {
    %c0_i32 = arith.constant 0 : i32
    %c0_i32_0 = arith.constant 0 : i32
    %c0_i32_1 = arith.constant 0 : i32
    return %arg0, %c0_i32, %c0_i32_0 : i32, i32, i32
  }
  func.func @transform_1(%arg0: i32) -> (i32, i32, i32) {
    %c0_i32 = arith.constant 0 : i32
    %c0_i32_0 = arith.constant 0 : i32
    %c0_i32_1 = arith.constant 0 : i32
    return %arg0, %c0_i32, %c0_i32_0 : i32, i32, i32
  }
  func.func @transform_2(%arg0: i32) -> (i32, i32, i32) {
    %c0_i32 = arith.constant 0 : i32
    %c0_i32_0 = arith.constant 0 : i32
    %c0_i32_1 = arith.constant 0 : i32
    return %arg0, %c0_i32, %c0_i32_0 : i32, i32, i32
  }
}

</mosaic_0001>

<llo_original>
// kernel: tpu_custom_call.1
$region0: #{tpu_custom_call.1}
  #allocation0 [shape = 'u32[]', space=smem, size = 0x4, offset = 0x4, fixed_abs, tag = 'smem constant byte address 0x4 - core index']
  #allocation1 [shape = 'u32[144,128]{1,0:T(1,128)}', space=vmem, size = 0x12000, scoped, tag = 'internal scratch']
  %s0 = inlined_call_operand.vmem [shape: f32[8,4,32], index: 0, kind: input, shape index: {}]
  %s1 = inlined_call_operand.vmem [shape: f32[64,1,32], index: 1, kind: input, shape index: {}]
  %s2 = inlined_call_operand.hbm [shape: f32[8,4,32], index: 2, kind: output, shape index: {}]
  %s3 = sld [smem:[#allocation0]]
  $region18: #{tpu_custom_call.1} parent=0
    _
  %s5 = ssub.s32 1, %s3
  %s6 = scalar_select 0, %s5, %s3
  $region1: #{tpu_custom_call.1} parent=0
    #allocation2 [shape = 'u8[16384]{0}', space=vmem, size = 0x4000, scoped, tag = 'output window, operand 0, single buffered']
    #allocation3 [shape = 's32[1]{0}', space=sflag, size = 0x4, scoped, tag = 'scoped memory for tpu_custom_call.1']
    %7 = vsyncpa [#allocation3], 0
    // Predicated region
    $region2: #{tpu_custom_call.1} parent=1 // pred_check
      _
    $region3: #{tpu_custom_call.1} parent=1 // pred_check_branch
      %9 = sbr.rel (0) target = $region5
    $region4: #{tpu_custom_call.1} parent=1 // pred_region
      _
    $region5: #{tpu_custom_call.1} parent=1 // pred_fallthru
      _
    // Predicated region
    $region6: #{tpu_custom_call.1} parent=1 // pred_check
      _
    $region7: #{tpu_custom_call.1} parent=1 // pred_check_branch
      %11 = sbr.rel (0) target = $region9
    $region8: #{tpu_custom_call.1} parent=1 // pred_region
      _
    $region9: #{tpu_custom_call.1} parent=1 // pred_fallthru
      _
    %v12 = vld [vmem:[%s0] sm:$0xf]
    %v13 = vld [vmem:[%s0 + $0x4] sm:$0xf]
    %v14 = vld [vmem:[%s0 + $0x8] sm:$0xf]
    %v15 = vld [vmem:[%s0 + $0xc] sm:$0xf]
    %v16 = vld [vmem:[%s0 + $0x10] sm:$0xf]
    %v17 = vld [vmem:[%s0 + $0x14] sm:$0xf]
    %v18 = vld [vmem:[%s0 + $0x18] sm:$0xf]
    %v19 = vld [vmem:[%s0 + $0x1c] sm:$0xf]
    %v20 = vld [vmem:[%s1] sm:$0x1]
    %v21 = vld [vmem:[%s1 + $0x1] sm:$0x1]
    %v22 = vld [vmem:[%s1 + $0x2] sm:$0x1]
    %v23 = vld [vmem:[%s1 + $0x3] sm:$0x1]
    %v24 = vld [vmem:[%s1 + $0x4] sm:$0x1]
    %v25 = vld [vmem:[%s1 + $0x5] sm:$0x1]
    %v26 = vld [vmem:[%s1 + $0x6] sm:$0x1]
    %v27 = vld [vmem:[%s1 + $0x7] sm:$0x1]
    %v36 = vlaneseq
    %v37 = vshrl.u32 %v36, 7
    %v38 = vsub.s32 0, %v37
    %v39 = vrot.slane %v20, %v38
    %v40 = vlaneseq
    %v41 = vshrl.u32 %v40, 7
    %v42 = vsub.s32 0, %v41
    %v43 = vrot.slane %v21, %v42
    %v44 = vlaneseq
    %v45 = vshrl.u32 %v44, 7
    %v46 = vsub.s32 0, %v45
    %v47 = vrot.slane %v22, %v46
    %v48 = vlaneseq
    %v49 = vshrl.u32 %v48, 7
    %v50 = vsub.s32 0, %v49
    %v51 = vrot.slane %v23, %v50
    %v52 = vlaneseq
    %v53 = vshrl.u32 %v52, 7
    %v54 = vsub.s32 0, %v53
    %v55 = vrot.slane %v24, %v54
    %v56 = vlaneseq
    %v57 = vshrl.u32 %v56, 7
    %v58 = vsub.s32 0, %v57
    %v59 = vrot.slane %v25, %v58
    %v60 = vlaneseq
    %v61 = vshrl.u32 %v60, 7
    %v62 = vsub.s32 0, %v61
    %v63 = vrot.slane %v26, %v62
    %v64 = vlaneseq
    %v65 = vshrl.u32 %v64, 7
    %v66 = vsub.s32 0, %v65
    %v67 = vrot.slane %v27, %v66
    %v76 = vadd.f32 %v12, %v39
    %v77 = vadd.f32 %v13, %v43
    %v78 = vadd.f32 %v14, %v47
    %v79 = vadd.f32 %v15, %v51
    %v80 = vadd.f32 %v16, %v55
    %v81 = vadd.f32 %v17, %v59
    %v82 = vadd.f32 %v18, %v63
    %v83 = vadd.f32 %v19, %v67
    %vm84 = vcmask 257024
    %85 = vst.msk [vmem:[#allocation2] sm:$0xf] %vm84, %v76
    %86 = vst.msk [vmem:[#allocation2 + $0x4] sm:$0xf] %vm84, %v77
    %87 = vst.msk [vmem:[#allocation2 + $0x8] sm:$0xf] %vm84, %v78
    %88 = vst.msk [vmem:[#allocation2 + $0xc] sm:$0xf] %vm84, %v79
    %89 = vst.msk [vmem:[#allocation2 + $0x10] sm:$0xf] %vm84, %v80
    %90 = vst.msk [vmem:[#allocation2 + $0x14] sm:$0xf] %vm84, %v81
    %91 = vst.msk [vmem:[#allocation2 + $0x18] sm:$0xf] %vm84, %v82
    %92 = vst.msk [vmem:[#allocation2 + $0x1c] sm:$0xf] %vm84, %v83
    // Predicated region
    $region10: #{tpu_custom_call.1} parent=1 // pred_check
      _
    $region11: #{tpu_custom_call.1} parent=1 // pred_check_branch
      %94 = sbr.rel (0) target = $region13
    $region12: #{tpu_custom_call.1} parent=1 // pred_region
      %s96 = ssub.s32 512, 512
      %97 = vsyncadd [#allocation3], %s96
      %s98 = sshll.u32 [#allocation2], 4
      %s99 = int_to_ptr.vmem [resolvable:$true] %s98
      %104 = dma.vmem_to_hbm [thread:$0]  %s99, 512, %s2, [#allocation3], 64, 64, 4
    $region13: #{tpu_custom_call.1} parent=1 // pred_fallthru
      _
    // Predicated region
    $region14: #{tpu_custom_call.1} parent=1 // pred_check
      _
    $region15: #{tpu_custom_call.1} parent=1 // pred_check_branch
      %106 = sbr.rel (0) target = $region17
    $region16: #{tpu_custom_call.1} parent=1 // pred_region
      %107 = dma.done [#allocation3], 512
    $region17: #{tpu_custom_call.1} parent=1 // pred_fallthru
      _
    %108 = vsyncpa [#allocation3], 1

</llo_original>
